<compile_context>
chip_gen: v7x
topology: tpu7x:2x2x1
jax: 0.10.0
libtpu: 0.0.40
codegen_flags: <defaults>
</compile_context>

<pallas_src>
import functools

import jax
import jax.numpy as jnp
from jax.experimental import pallas as pl
from jax.experimental.pallas import tpu as pltpu


def _round_up(x, m):
    return ((x + m - 1) // m) * m


def _value_mlp_kernel(num_inputs, num_layers, *refs):
    """Fused Value MLP for one (critic, batch-tile) grid step.

    refs = (x_0..x_{m-1}, W0_0..W0_{m-1}, b0, W1, b1, ..., out_ref)

    Weight refs carry a squeezed leading critic axis, so they are 2-D here.
    Layer-0's weight is split row-wise per observation stream, so torch.cat
    becomes an implicit sum of partial matmuls.  ReLU follows every layer
    except the last (matches the nn.Sequential built in Value.__init__).
    """
    x_refs = refs[:num_inputs]
    out_ref = refs[-1]
    p_refs = refs[num_inputs:-1]

    # Layer 0: sum of per-stream partial matmuls (implicit concat).
    h = None
    for i in range(num_inputs):
        x = x_refs[i][...]
        w = p_refs[i][...]
        if x.dtype != w.dtype:
            x = x.astype(w.dtype)
        part = jnp.dot(x, w, preferred_element_type=jnp.float32)
        h = part if h is None else h + part
    h = h + p_refs[num_inputs][...].astype(jnp.float32)
    if num_layers > 1:
        h = jnp.maximum(h, 0.0)

    rest = p_refs[num_inputs + 1:]
    for layer in range(1, num_layers):
        w_ref = rest[2 * (layer - 1)]
        b_ref = rest[2 * (layer - 1) + 1]
        a = h.astype(w_ref.dtype) if h.dtype != w_ref.dtype else h
        h = jnp.dot(a, w_ref[...], preferred_element_type=jnp.float32)
        h = h + b_ref[...].astype(jnp.float32)
        if layer != num_layers - 1:
            h = jnp.maximum(h, 0.0)

    out_ref[...] = h.astype(out_ref.dtype)


def prepare_value_params(params_list, feats, dtype=None):
    """Pad, split and stack critic parameters once (hoisted out of forward).

    params_list: list over critics; each critic is a list of (W, b), W of
                 shape (in_features, out_features).
    feats:       per-stream flattened feature sizes (layer-0 row split).
    dtype:       optional compute dtype for the weights (e.g. jnp.bfloat16).

    Output dims are zero-padded to multiples of 128 so every matmul / store
    is lane-dense; zero padding is mathematically inert.
    """
    num_layers = len(params_list[0])
    n_support = int(params_list[0][-1][0].shape[1])
    flatten = sum(feats)

    padded_per_critic = []
    for params in params_list:
        assert len(params) == num_layers
        padded = []
        prev_out_pad = flatten
        for l, (w, b) in enumerate(params):
            in_dim, out_dim = int(w.shape[0]), int(w.shape[1])
            out_pad = _round_up(out_dim, 128)
            row_pad = (prev_out_pad - in_dim) if l > 0 else 0
            w = jnp.pad(w, ((0, row_pad), (0, out_pad - out_dim)))
            b = jnp.pad(b.reshape(1, -1), ((0, 0), (0, out_pad - out_dim)))
            if dtype is not None:
                w = w.astype(dtype)
                b = b.astype(dtype)
            padded.append((w, b))
            prev_out_pad = out_pad
        padded_per_critic.append(padded)

    def stack(getter):
        return jnp.stack([getter(p) for p in padded_per_critic], axis=0)

    # Layer-0 weight split row-wise per observation stream; leading C axis.
    w0_splits = []
    off = 0
    for f in feats:
        lo = off
        w0_splits.append(stack(lambda p, lo=lo, f=f: p[0][0][lo:lo + f, :]))
        off += f
    b0 = stack(lambda p: p[0][1])
    rest = []
    for l in range(1, num_layers):
        rest.append(stack(lambda p, l=l: p[l][0]))
        rest.append(stack(lambda p, l=l: p[l][1]))

    return dict(
        w0_splits=w0_splits,
        b0=b0,
        rest=rest,
        num_layers=num_layers,
        n_support=n_support,
        n_out_pad=int(padded_per_critic[0][-1][0].shape[1]),
        feats=tuple(feats),
        num_critics=len(params_list),
        param_dtype=w0_splits[0].dtype,
    )


def _choose_tm(batch, requested, outer_parallel=1, min_grid_steps=2):
    """Pick the batch tile.

    Large tiles (default request 512) amortize the ~0.35us per-grid-step
    overhead of this HBM-bound kernel, but we keep at least `min_grid_steps`
    total parallel grid steps (critic axis x batch axis) so a megacore chip
    (v7x) always has work for both TensorCores.
    """
    tm = max(8, min(_round_up(requested, 8), _round_up(batch, 8)))
    if outer_parallel * pl.cdiv(batch, tm) < min_grid_steps and batch > 8:
        per_axis = pl.cdiv(min_grid_steps, outer_parallel)
        tm = max(8, _round_up(pl.cdiv(batch, per_axis), 8))
    return tm


def _value_pallas_call(flats, prep, *, tm, out_dtype):
    feats = prep['feats']
    batch = int(flats[0].shape[0])
    num_inputs = len(feats)
    num_layers = prep['num_layers']
    n_out_pad = prep['n_out_pad']
    num_critics = prep['num_critics']

    grid = (num_critics, pl.cdiv(batch, tm))
    kernel = functools.partial(_value_mlp_kernel, num_inputs, num_layers)

    # Activations: batch-tiled; no wrapper-side padding — the partial tail
    # block's OOB reads are harmless (rows independent) and its OOB stores
    # are masked by Pallas.
    x_specs = [pl.BlockSpec((tm, f), lambda c, i: (i, 0)) for f in feats]

    # Weights: squeezed leading critic axis, resident across the batch axis.
    w_specs, w_args = [], []
    for w in prep['w0_splits']:
        w_specs.append(pl.BlockSpec((pl.Squeezed(),) + tuple(w.shape[1:]),
                                    lambda c, i: (c, 0, 0)))
        w_args.append(w)
    w_specs.append(pl.BlockSpec((pl.Squeezed(),) + tuple(prep['b0'].shape[1:]),
                                lambda c, i: (c, 0, 0)))
    w_args.append(prep['b0'])
    for p in prep['rest']:
        w_specs.append(pl.BlockSpec((pl.Squeezed(),) + tuple(p.shape[1:]),
                                    lambda c, i: (c, 0, 0)))
        w_args.append(p)

    out_spec = pl.BlockSpec((pl.Squeezed(), tm, n_out_pad),
                            lambda c, i: (c, i, 0))

    # Advisory cost estimate + a tight-but-safe VMEM budget.
    act_itemsize = jnp.dtype(flats[0].dtype).itemsize
    out_itemsize = jnp.dtype(out_dtype).itemsize
    p_bytes = sum(int(a.size) * a.dtype.itemsize for a in w_args)
    matmul_ws = list(prep['w0_splits']) + prep['rest'][0::2]
    flops = 2 * batch * sum(int(w.size) for w in matmul_ws)  # includes C
    bytes_accessed = (p_bytes
                      + num_critics * batch * sum(feats) * act_itemsize
                      + num_critics * batch * n_out_pad * out_itemsize)
    cost = pl.CostEstimate(flops=int(flops), transcendentals=0,
                           bytes_accessed=int(bytes_accessed))
    tile_bytes = (tm * sum(feats) * act_itemsize       # input tiles
                  + tm * n_out_pad * out_itemsize      # output tile
                  + tm * n_out_pad * 4)                # f32 hidden/acc headroom
    vmem_limit = int(min(100 << 20,
                         max(16 << 20, 2 * p_bytes + 4 * tile_bytes + (4 << 20))))

    return pl.pallas_call(
        kernel,
        grid=grid,
        in_specs=x_specs + w_specs,
        out_specs=out_spec,
        out_shape=jax.ShapeDtypeStruct((num_critics, batch, n_out_pad), out_dtype),
        compiler_params=pltpu.CompilerParams(
            dimension_semantics=("parallel", "parallel"),
            vmem_limit_bytes=vmem_limit,
        ),
        cost_estimate=cost,
    )(*flats, *w_args)


def value_forward_ensemble(xs, params_list, *, tm=512, out_dtype=jnp.float32,
                           compute_dtype=None, trim_output=True, prepared=None):
    """Evaluate C critics (same architecture, different weights) in one call.

    xs:          list of (B, ...) observation arrays (Identity preprocess).
    params_list: list over critics of lists of (W, b), W = (in, out).
    tm:          requested batch tile (auto-capped; >= 2 grid steps kept).
    compute_dtype: e.g. jnp.bfloat16 for an end-to-end low-precision DMA path
                   (f32 accumulation is preserved inside the kernel).
    Returns (C, B, n_support) (or the padded (C, B, n_out_pad) buffer if
    trim_output=False, for a downstream kernel to slice/consume).
    """
    # Identity preprocess: flatten each stream (no HBM concat; the concat is
    # folded into the kernel as split layer-0 matmuls).
    flats = [x.reshape(x.shape[0], -1) for x in xs]
    feats = tuple(int(f.shape[1]) for f in flats)
    batch = int(flats[0].shape[0])

    prep = prepared if prepared is not None else prepare_value_params(
        params_list, feats, dtype=compute_dtype)

    # Cast activations in the wrapper (before the DMA) so a bf16 path really
    # halves HBM input bytes; no-op for the default f32 path.
    pdt = prep['param_dtype']
    flats = [f if f.dtype == pdt else f.astype(pdt) for f in flats]

    tile = _choose_tm(batch, tm, outer_parallel=prep['num_critics'])
    out = _value_pallas_call(flats, prep, tm=tile, out_dtype=out_dtype)

    if trim_output:
        # Under jit this slice fuses into the consumer; pass trim_output=False
        # to hand the lane-dense padded buffer straight to e.g. the quantile
        # loss kernel.
        out = out[:, :, :prep['n_support']]
    return out


def value_forward(xs, params, *, tm=512, out_dtype=jnp.float32,
                  compute_dtype=None, trim_output=True):
    """Forward pass of a single Value critic (see value_forward_ensemble)."""
    out = value_forward_ensemble(xs, [params], tm=tm, out_dtype=out_dtype,
                                 compute_dtype=compute_dtype,
                                 trim_output=trim_output)
    return out[0]


def init_value_params(key, flatten_size, node, n_support, hidden_n=1):
    """Deterministic init mimicking nn.Linear's U(-1/sqrt(fan_in), 1/sqrt(fan_in))."""
    dims = [flatten_size] + [node] * hidden_n + [n_support]
    params = []
    for i in range(len(dims) - 1):
        fan_in, fan_out = dims[i], dims[i + 1]
        key, kw, kb = jax.random.split(key, 3)
        bound = 1.0 / jnp.sqrt(jnp.float32(fan_in))
        w = jax.random.uniform(kw, (fan_in, fan_out), jnp.float32, -bound, bound)
        b = jax.random.uniform(kb, (fan_out,), jnp.float32, -bound, bound)
        params.append((w, b))
    return params


if __name__ == "__main__":
    # Small, module-consistent shapes:
    #   state_size = [(24,), (8,)] -> Identity preprocess, flatten_size = 32
    #   node = 128, hidden_n = 1, n_support = 200 (quantile supports)
    batch = 8
    state_dims = [24, 8]
    node = 128
    n_support = 200
    hidden_n = 1
    flatten_size = sum(state_dims)

    key = jax.random.PRNGKey(0)
    key, k0, k1, kp1, kp2 = jax.random.split(key, 5)
    xs = [
        jax.random.normal(k0, (batch, state_dims[0]), jnp.float32),
        jax.random.normal(k1, (batch, state_dims[1]), jnp.float32),
    ]
    params1 = init_value_params(kp1, flatten_size, node, n_support, hidden_n)
    params2 = init_value_params(kp2, flatten_size, node, n_support, hidden_n)

    def ref_forward(xs_, params_):
        h = jnp.concatenate([x.reshape(x.shape[0], -1) for x in xs_], axis=-1)
        for i, (w, b) in enumerate(params_):
            h = h @ w + b
            if i != len(params_) - 1:
                h = jnp.maximum(h, 0.0)
        return h

    ref1 = ref_forward(xs, params1)
    ref2 = ref_forward(xs, params2)

    # Fused twin-critic evaluation: one pallas_call, grid = (2, batch_tiles).
    v2 = jax.block_until_ready(value_forward_ensemble(xs, [params1, params2]))
    assert v2.shape == (2, batch, n_support)
    assert jnp.allclose(v2[0], ref1, atol=1e-4, rtol=1e-4)
    assert jnp.allclose(v2[1], ref2, atol=1e-4, rtol=1e-4)

    # Single-critic path with a ragged batch (partial tail tile, no wrapper pad).
    xs_small = [x[:5] for x in xs]
    v_small = jax.block_until_ready(value_forward(xs_small, params1))
    assert v_small.shape == (5, n_support)
    assert jnp.allclose(v_small, ref1[:5], atol=1e-4, rtol=1e-4)

    # bf16 end-to-end path (halved HBM activation/weight bytes; f32 accumulate).
    v_bf16 = jax.block_until_ready(
        value_forward(xs, params1, compute_dtype=jnp.bfloat16))
    assert v_bf16.shape == (batch, n_support)
    assert jnp.allclose(v_bf16.astype(jnp.float32), ref1, atol=5e-2, rtol=5e-2)

    print("KERNEL_OK")
</pallas_src>

<mosaic_0001>
module attributes {stable_mosaic.version = 11 : i64} {
  func.func @_value_mlp_kernel(%arg0: i32, %arg1: i32, %arg2: memref<8x24xf32, #tpu.memory_space<vmem>>, %arg3: memref<8x8xf32, #tpu.memory_space<vmem>>, %arg4: memref<1x24x128xf32, #tpu.memory_space<vmem>>, %arg5: memref<1x8x128xf32, #tpu.memory_space<vmem>>, %arg6: memref<1x1x128xf32, #tpu.memory_space<vmem>>, %arg7: memref<1x128x256xf32, #tpu.memory_space<vmem>>, %arg8: memref<1x1x256xf32, #tpu.memory_space<vmem>>, %arg9: memref<1x8x256xf32, #tpu.memory_space<vmem>>) attributes {dimension_semantics = [#tpu.dimension_semantics<parallel>, #tpu.dimension_semantics<parallel>], iteration_bounds = array<i64: 2, 1>, scalar_prefetch = 0 : i64, scratch_operands = 0 : i64, tpu.core_type = #tpu.core_type<tc>, window_params = [{transform_indices = @transform_0, window_bounds = array<i64: 8, 24>}, {transform_indices = @transform_1, window_bounds = array<i64: 8, 8>}, {transform_indices = @transform_2, window_bounds = array<i64: 1, 24, 128>}, {transform_indices = @transform_3, window_bounds = array<i64: 1, 8, 128>}, {transform_indices = @transform_4, window_bounds = array<i64: 1, 1, 128>}, {transform_indices = @transform_5, window_bounds = array<i64: 1, 128, 256>}, {transform_indices = @transform_6, window_bounds = array<i64: 1, 1, 256>}, {transform_indices = @transform_7, window_bounds = array<i64: 1, 8, 256>}]} {
    %c0 = arith.constant 0 : index
    %c0_0 = arith.constant 0 : index
    %0 = vector.load %arg2[%c0, %c0_0] : memref<8x24xf32, #tpu.memory_space<vmem>>, vector<8x24xf32>
    %c0_1 = arith.constant 0 : index
    %c0_2 = arith.constant 0 : index
    %c0_3 = arith.constant 0 : index
    %1 = vector.load %arg4[%c0_1, %c0_2, %c0_3] : memref<1x24x128xf32, #tpu.memory_space<vmem>>, vector<1x24x128xf32>
    %2 = vector.shape_cast %1 : vector<1x24x128xf32> to vector<24x128xf32>
    %cst = arith.constant dense<0.000000e+00> : vector<8x128xf32>
    %3 = tpu.matmul %0, %2, %cst {dimension_numbers = #tpu.dot_dimension_numbers<[1], [0], [0], [1], [0, 0, 1, 1], [], []>} : vector<8x24xf32>, vector<24x128xf32>, vector<8x128xf32> -> vector<8x128xf32>
    %c0_4 = arith.constant 0 : index
    %c0_5 = arith.constant 0 : index
    %4 = vector.load %arg3[%c0_4, %c0_5] : memref<8x8xf32, #tpu.memory_space<vmem>>, vector<8x8xf32>
    %c0_6 = arith.constant 0 : index
    %c0_7 = arith.constant 0 : index
    %c0_8 = arith.constant 0 : index
    %5 = vector.load %arg5[%c0_6, %c0_7, %c0_8] : memref<1x8x128xf32, #tpu.memory_space<vmem>>, vector<1x8x128xf32>
    %6 = vector.shape_cast %5 : vector<1x8x128xf32> to vector<8x128xf32>
    %cst_9 = arith.constant dense<0.000000e+00> : vector<8x128xf32>
    %7 = tpu.matmul %4, %6, %cst_9 {dimension_numbers = #tpu.dot_dimension_numbers<[1], [0], [0], [1], [0, 0, 1, 1], [], []>} : vector<8x8xf32>, vector<8x128xf32>, vector<8x128xf32> -> vector<8x128xf32>
    %8 = arith.addf %3, %7 : vector<8x128xf32>
    %c0_10 = arith.constant 0 : index
    %c0_11 = arith.constant 0 : index
    %c0_12 = arith.constant 0 : index
    %9 = vector.load %arg6[%c0_10, %c0_11, %c0_12] : memref<1x1x128xf32, #tpu.memory_space<vmem>>, vector<1x1x128xf32>
    %10 = vector.shape_cast %9 : vector<1x1x128xf32> to vector<1x128xf32>
    %11 = vector.broadcast %10 : vector<1x128xf32> to vector<8x128xf32>
    %12 = arith.addf %8, %11 : vector<8x128xf32>
    %cst_13 = arith.constant 0.000000e+00 : f32
    %13 = vector.broadcast %cst_13 : f32 to vector<8x128xf32>
    %14 = arith.maximumf %12, %13 : vector<8x128xf32>
    %c0_14 = arith.constant 0 : index
    %c0_15 = arith.constant 0 : index
    %c0_16 = arith.constant 0 : index
    %15 = vector.load %arg7[%c0_14, %c0_15, %c0_16] : memref<1x128x256xf32, #tpu.memory_space<vmem>>, vector<1x128x256xf32>
    %16 = vector.shape_cast %15 : vector<1x128x256xf32> to vector<128x256xf32>
    %cst_17 = arith.constant dense<0.000000e+00> : vector<8x256xf32>
    %17 = tpu.matmul %14, %16, %cst_17 {dimension_numbers = #tpu.dot_dimension_numbers<[1], [0], [0], [1], [0, 0, 1, 1], [], []>} : vector<8x128xf32>, vector<128x256xf32>, vector<8x256xf32> -> vector<8x256xf32>
    %c0_18 = arith.constant 0 : index
    %c0_19 = arith.constant 0 : index
    %c0_20 = arith.constant 0 : index
    %18 = vector.load %arg8[%c0_18, %c0_19, %c0_20] : memref<1x1x256xf32, #tpu.memory_space<vmem>>, vector<1x1x256xf32>
    %19 = vector.shape_cast %18 : vector<1x1x256xf32> to vector<1x256xf32>
    %20 = vector.broadcast %19 : vector<1x256xf32> to vector<8x256xf32>
    %21 = arith.addf %17, %20 : vector<8x256xf32>
    %c0_21 = arith.constant 0 : index
    %c0_22 = arith.constant 0 : index
    %c0_23 = arith.constant 0 : index
    %22 = vector.load %arg9[%c0_21, %c0_22, %c0_23] : memref<1x8x256xf32, #tpu.memory_space<vmem>>, vector<1x8x256xf32>
    %23 = vector.shape_cast %22 : vector<1x8x256xf32> to vector<8x256xf32>
    %24 = vector.shape_cast %21 : vector<8x256xf32> to vector<1x8x256xf32>
    tpu.vector_store %arg9[%c0_21, %c0_22, %c0_23], %24 {strides = array<i32>} : memref<1x8x256xf32, #tpu.memory_space<vmem>>, vector<1x8x256xf32>,
    return
  }
  func.func @transform_0(%arg0: i32, %arg1: i32) -> (i32, i32) {
    %c0_i32 = arith.constant 0 : i32
    %c0_i32_0 = arith.constant 0 : i32
    return %arg1, %c0_i32 : i32, i32
  }
  func.func @transform_1(%arg0: i32, %arg1: i32) -> (i32, i32) {
    %c0_i32 = arith.constant 0 : i32
    %c0_i32_0 = arith.constant 0 : i32
    return %arg1, %c0_i32 : i32, i32
  }
  func.func @transform_2(%arg0: i32, %arg1: i32) -> (i32, i32, i32) {
    %c0_i32 = arith.constant 0 : i32
    %c0_i32_0 = arith.constant 0 : i32
    %c0_i32_1 = arith.constant 0 : i32
    return %arg0, %c0_i32, %c0_i32_0 : i32, i32, i32
  }
  func.func @transform_3(%arg0: i32, %arg1: i32) -> (i32, i32, i32) {
    %c0_i32 = arith.constant 0 : i32
    %c0_i32_0 = arith.constant 0 : i32
    %c0_i32_1 = arith.constant 0 : i32
    return %arg0, %c0_i32, %c0_i32_0 : i32, i32, i32
  }
  func.func @transform_4(%arg0: i32, %arg1: i32) -> (i32, i32, i32) {
    %c0_i32 = arith.constant 0 : i32
    %c0_i32_0 = arith.constant 0 : i32
    %c0_i32_1 = arith.constant 0 : i32
    return %arg0, %c0_i32, %c0_i32_0 : i32, i32, i32
  }
  func.func @transform_5(%arg0: i32, %arg1: i32) -> (i32, i32, i32) {
    %c0_i32 = arith.constant 0 : i32
    %c0_i32_0 = arith.constant 0 : i32
    %c0_i32_1 = arith.constant 0 : i32
    return %arg0, %c0_i32, %c0_i32_0 : i32, i32, i32
  }
  func.func @transform_6(%arg0: i32, %arg1: i32) -> (i32, i32, i32) {
    %c0_i32 = arith.constant 0 : i32
    %c0_i32_0 = arith.constant 0 : i32
    %c0_i32_1 = arith.constant 0 : i32
    return %arg0, %c0_i32, %c0_i32_0 : i32, i32, i32
  }
  func.func @transform_7(%arg0: i32, %arg1: i32) -> (i32, i32, i32) {
    %c0_i32 = arith.constant 0 : i32
    %c0_i32_0 = arith.constant 0 : i32
    return %arg0, %arg1, %c0_i32 : i32, i32, i32
  }
}

</mosaic_0001>

<llo_original>
// kernel: tpu_custom_call.1
$region0: #{tpu_custom_call.1}
  #allocation0 [shape = 'u32[]', space=smem, size = 0x4, offset = 0x4, fixed_abs, tag = 'smem constant byte address 0x4 - core index']
  #allocation1 [shape = 'u32[144,128]{1,0:T(1,128)}', space=vmem, size = 0x12000, scoped, tag = 'internal scratch']
  %s0 = inlined_call_operand.hbm [shape: f32[8,24], index: 0, kind: input, shape index: {}]
  %s1 = inlined_call_operand.hbm [shape: f32[8,8], index: 1, kind: input, shape index: {}]
  %s2 = inlined_call_operand.hbm [shape: f32[2,24,128], index: 2, kind: input, shape index: {}]
  %s3 = inlined_call_operand.hbm [shape: f32[2,8,128], index: 3, kind: input, shape index: {}]
  %s4 = inlined_call_operand.vmem [shape: f32[2,1,128], index: 4, kind: input, shape index: {}]
  %s5 = inlined_call_operand.hbm [shape: f32[2,128,256], index: 5, kind: input, shape index: {}]
  %s6 = inlined_call_operand.vmem [shape: f32[2,1,256], index: 6, kind: input, shape index: {}]
  %s7 = inlined_call_operand.hbm [shape: f32[2,8,256], index: 7, kind: output, shape index: {}]
  %s8 = sld [smem:[#allocation0]]
  $region81: #{tpu_custom_call.1} parent=0
    _
  %s10 = ssub.s32 1, %s8
  %s11 = scalar_select 0, %s10, %s8
  $region1: #{tpu_custom_call.1} parent=0
    #allocation2 [shape = 'u8[4096]{0}', space=vmem, size = 0x1000, scoped, tag = 'input window, operand 0, single buffered']
    #allocation3 [shape = 's32[2]{0}', space=sflag, size = 0x8, scoped, tag = 'scoped memory for tpu_custom_call.1']
    #allocation4 [shape = 's32[2]{0}', space=sflag, size = 0x8, scoped, tag = 'scoped memory for tpu_custom_call.1']
    #allocation5 [shape = 'u8[4096]{0}', space=vmem, size = 0x1000, scoped, tag = 'input window, operand 1, single buffered']
    #allocation6 [shape = 's32[1]{0}', space=sflag, size = 0x4, scoped, tag = 'scoped memory for tpu_custom_call.1']
    #allocation7 [shape = 'u8[24576]{0}', space=vmem, size = 0x6000, scoped, tag = 'input window, operand 2']
    #allocation8 [shape = 'u8[8192]{0}', space=vmem, size = 0x2000, scoped, tag = 'input window, operand 3']
    #allocation9 [shape = 'u8[262144]{0}', space=vmem, size = 0x40000, scoped, tag = 'input window, operand 5']
    #allocation10 [shape = 'u8[16384]{0}', space=vmem, size = 0x4000, scoped, tag = 'output window, operand 0']
    %12 = vsyncpa [#allocation3], 0
    %13 = vsyncpa [#allocation6], 0
    %14 = vsyncpa [#allocation4], 0
    %s15 = scalar_lea.sflag [#allocation4], 1
    %16 = vsyncpa %s15, 0
    loop: start=0, step=1, limit=4
    $region2: #{tpu_custom_call.1} parent=1 // loop_pre_header
      _
    $region3: #{tpu_custom_call.1} parent=1 // loop_header
      %s18 = sphi 0, %s22
      %p19 = scmp.ge.s32.totalorder %s18, 4
      %s25 = sphi 0, %s37
      %s26 = sphi 0, %s33
      %s27 = sphi 0, %s25
      %s28 = sphi 0, %s26
      %s29 = sphi 0, %s27
      %s30 = sphi 0, %s28
      %s40 = sphi 0, %s42
      %s43 = sphi 0, %s40
      %s44 = sphi 0, %s43
      %s60 = sphi 0, %s44
      %s66 = sphi 0, %s68
      %s69 = sphi 0, %s66
      %s70 = sphi 0, %s69
      %s86 = sphi 0, %s70
      %s92 = sphi 0, %s94
      %s95 = sphi 0, %s92
      %s96 = sphi 0, %s95
      %s112 = sphi 0, %s96
      %s118 = sphi 0, %s120
      %s121 = sphi 0, %s118
      %s122 = sphi 0, %s121
      %s138 = sphi 0, %s122
      %s144 = sphi 0, %s146
      %s147 = sphi 0, %s144
      %s148 = sphi 0, %s147
      %s164 = sphi 0, %s148
      %s170 = sphi 0, %s172
      %s173 = sphi 0, %s170
      %s174 = sphi 0, %s173
      %s190 = sphi 0, %s174
      %s196 = sphi 0, %s198
      %s199 = sphi 0, %s196
      %s200 = sphi 0, %s199
      %s216 = sphi 0, %s200
      %s224 = sphi 0, %s226
      %s227 = sphi 0, %s224
      %s228 = sphi 0, %s227
      %s244 = sphi 0, %s228
    $region4: #{tpu_custom_call.1} parent=1 // loop_header_branch
      %21 = sbr.rel (%p19) target = $region8
    $region5: #{tpu_custom_call.1} parent=1 // loop_body
      %s23 = ssub.s32 %s18, 1
      %s24 = ssub.s32 %s18, 2
      %s31 = sadd.s32 1, %s26
      %p32 = scmp.ge.s32.totalorder %s31, 1
      %s33 = scalar_select %p32, 0, %s31
      %s34 = sadd.s32 1, %s25
      %s35 = scalar_select %p32, %s34, %s25
      %p36 = scmp.ge.s32.totalorder %s35, 2
      %s37 = scalar_select %p36, 0, %s35
      %s38 = ssub.s32 %s26, %s33
      %p39 = scmp.eq.s32.totalorder %s38, 0
      %s41 = sadd.s32 %s40, 1
      %s42 = scalar_select %p39, %s40, %s41
      %p45 = pneg %p39
      %p46 = scmp.eq.s32.totalorder %s18, 1
      %p47 = por %p45, %p46
      %p48 = scmp.ne.s32.totalorder %s40, %s43
      %p49 = scmp.eq.s32.totalorder %s18, 0
      %p50 = por %p48, %p49
      %p51 = scmp.ne.s32.totalorder %s40, %s43
      %p52 = scmp.eq.s32.totalorder %s23, 1
      %p53 = por %p51, %p52
      %p54 = scmp.ne.s32.totalorder %s43, %s44
      %p55 = scmp.eq.s32.totalorder %s23, 0
      %p56 = por %p54, %p55
      %p57 = scmp.ne.s32.totalorder %s43, %s44
      %p58 = scmp.eq.s32.totalorder %s24, 1
      %p59 = por %p57, %p58
      %p61 = scmp.ne.s32.totalorder %s44, %s60
      %p62 = scmp.eq.s32.totalorder %s24, 0
      %p63 = por %p61, %p62
      %s64 = ssub.s32 %s26, %s33
      %p65 = scmp.eq.s32.totalorder %s64, 0
      %s67 = sadd.s32 %s66, 1
      %s68 = scalar_select %p65, %s66, %s67
      %p71 = pneg %p65
      %p72 = scmp.eq.s32.totalorder %s18, 1
      %p73 = por %p71, %p72
      %p74 = scmp.ne.s32.totalorder %s66, %s69
      %p75 = scmp.eq.s32.totalorder %s18, 0
      %p76 = por %p74, %p75
      %p77 = scmp.ne.s32.totalorder %s66, %s69
      %p78 = scmp.eq.s32.totalorder %s23, 1
      %p79 = por %p77, %p78
      %p80 = scmp.ne.s32.totalorder %s69, %s70
      %p81 = scmp.eq.s32.totalorder %s23, 0
      %p82 = por %p80, %p81
      %p83 = scmp.ne.s32.totalorder %s69, %s70
      %p84 = scmp.eq.s32.totalorder %s24, 1
      %p85 = por %p83, %p84
      %p87 = scmp.ne.s32.totalorder %s70, %s86
      %p88 = scmp.eq.s32.totalorder %s24, 0
      %p89 = por %p87, %p88
      %s90 = ssub.s32 %s25, %s37
      %p91 = scmp.eq.s32.totalorder %s90, 0
      %s93 = sadd.s32 %s92, 1
      %s94 = scalar_select %p91, %s92, %s93
      %p97 = pneg %p91
      %p98 = scmp.eq.s32.totalorder %s18, 1
      %p99 = por %p97, %p98
      %p100 = scmp.ne.s32.totalorder %s92, %s95
      %p101 = scmp.eq.s32.totalorder %s18, 0
      %p102 = por %p100, %p101
      %p103 = scmp.ne.s32.totalorder %s92, %s95
      %p104 = scmp.eq.s32.totalorder %s23, 1
      %p105 = por %p103, %p104
      %p106 = scmp.ne.s32.totalorder %s95, %s96
      %p107 = scmp.eq.s32.totalorder %s23, 0
      %p108 = por %p106, %p107
      %p109 = scmp.ne.s32.totalorder %s95, %s96
      %p110 = scmp.eq.s32.totalorder %s24, 1
      %p111 = por %p109, %p110
      %p113 = scmp.ne.s32.totalorder %s96, %s112
      %p114 = scmp.eq.s32.totalorder %s24, 0
      %p115 = por %p113, %p114
      %s116 = ssub.s32 %s25, %s37
      %p117 = scmp.eq.s32.totalorder %s116, 0
      %s119 = sadd.s32 %s118, 1
      %s120 = scalar_select %p117, %s118, %s119
      %p123 = pneg %p117
      %p124 = scmp.eq.s32.totalorder %s18, 1
      %p125 = por %p123, %p124
      %p126 = scmp.ne.s32.totalorder %s118, %s121
      %p127 = scmp.eq.s32.totalorder %s18, 0
      %p128 = por %p126, %p127
      %p129 = scmp.ne.s32.totalorder %s118, %s121
      %p130 = scmp.eq.s32.totalorder %s23, 1
      %p131 = por %p129, %p130
      %p132 = scmp.ne.s32.totalorder %s121, %s122
      %p133 = scmp.eq.s32.totalorder %s23, 0
      %p134 = por %p132, %p133
      %p135 = scmp.ne.s32.totalorder %s121, %s122
      %p136 = scmp.eq.s32.totalorder %s24, 1
      %p137 = por %p135, %p136
      %p139 = scmp.ne.s32.totalorder %s122, %s138
      %p140 = scmp.eq.s32.totalorder %s24, 0
      %p141 = por %p139, %p140
      %s142 = ssub.s32 %s25, %s37
      %p143 = scmp.eq.s32.totalorder %s142, 0
      %s145 = sadd.s32 %s144, 1
      %s146 = scalar_select %p143, %s144, %s145
      %p149 = pneg %p143
      %p150 = scmp.eq.s32.totalorder %s18, 1
      %p151 = por %p149, %p150
      %p152 = scmp.ne.s32.totalorder %s144, %s147
      %p153 = scmp.eq.s32.totalorder %s18, 0
      %p154 = por %p152, %p153
      %p155 = scmp.ne.s32.totalorder %s144, %s147
      %p156 = scmp.eq.s32.totalorder %s23, 1
      %p157 = por %p155, %p156
      %p158 = scmp.ne.s32.totalorder %s147, %s148
      %p159 = scmp.eq.s32.totalorder %s23, 0
      %p160 = por %p158, %p159
      %p161 = scmp.ne.s32.totalorder %s147, %s148
      %p162 = scmp.eq.s32.totalorder %s24, 1
      %p163 = por %p161, %p162
      %p165 = scmp.ne.s32.totalorder %s148, %s164
      %p166 = scmp.eq.s32.totalorder %s24, 0
      %p167 = por %p165, %p166
      %s168 = ssub.s32 %s25, %s37
      %p169 = scmp.eq.s32.totalorder %s168, 0
      %s171 = sadd.s32 %s170, 1
      %s172 = scalar_select %p169, %s170, %s171
      %p175 = pneg %p169
      %p176 = scmp.eq.s32.totalorder %s18, 1
      %p177 = por %p175, %p176
      %p178 = scmp.ne.s32.totalorder %s170, %s173
      %p179 = scmp.eq.s32.totalorder %s18, 0
      %p180 = por %p178, %p179
      %p181 = scmp.ne.s32.totalorder %s170, %s173
      %p182 = scmp.eq.s32.totalorder %s23, 1
      %p183 = por %p181, %p182
      %p184 = scmp.ne.s32.totalorder %s173, %s174
      %p185 = scmp.eq.s32.totalorder %s23, 0
      %p186 = por %p184, %p185
      %p187 = scmp.ne.s32.totalorder %s173, %s174
      %p188 = scmp.eq.s32.totalorder %s24, 1
      %p189 = por %p187, %p188
      %p191 = scmp.ne.s32.totalorder %s174, %s190
      %p192 = scmp.eq.s32.totalorder %s24, 0
      %p193 = por %p191, %p192
      %s194 = ssub.s32 %s25, %s37
      %p195 = scmp.eq.s32.totalorder %s194, 0
      %s197 = sadd.s32 %s196, 1
      %s198 = scalar_select %p195, %s196, %s197
      %p201 = pneg %p195
      %p202 = scmp.eq.s32.totalorder %s18, 1
      %p203 = por %p201, %p202
      %p204 = scmp.ne.s32.totalorder %s196, %s199
      %p205 = scmp.eq.s32.totalorder %s18, 0
      %p206 = por %p204, %p205
      %p207 = scmp.ne.s32.totalorder %s196, %s199
      %p208 = scmp.eq.s32.totalorder %s23, 1
      %p209 = por %p207, %p208
      %p210 = scmp.ne.s32.totalorder %s199, %s200
      %p211 = scmp.eq.s32.totalorder %s23, 0
      %p212 = por %p210, %p211
      %p213 = scmp.ne.s32.totalorder %s199, %s200
      %p214 = scmp.eq.s32.totalorder %s24, 1
      %p215 = por %p213, %p214
      %p217 = scmp.ne.s32.totalorder %s200, %s216
      %p218 = scmp.eq.s32.totalorder %s24, 0
      %p219 = por %p217, %p218
      %s220 = ssub.s32 %s25, %s37
      %s221 = ssub.s32 %s26, %s33
      %s222 = sor.u32 %s220, %s221
      %p223 = scmp.eq.s32.totalorder %s222, 0
      %s225 = sadd.s32 %s224, 1
      %s226 = scalar_select %p223, %s224, %s225
      %p229 = pneg %p223
      %p230 = scmp.eq.s32.totalorder %s18, 1
      %p231 = por %p229, %p230
      %p232 = scmp.ne.s32.totalorder %s224, %s227
      %p233 = scmp.eq.s32.totalorder %s18, 0
      %p234 = por %p232, %p233
      %p235 = scmp.ne.s32.totalorder %s224, %s227
      %p236 = scmp.eq.s32.totalorder %s23, 1
      %p237 = por %p235, %p236
      %p238 = scmp.ne.s32.totalorder %s227, %s228
      %p239 = scmp.eq.s32.totalorder %s23, 0
      %p240 = por %p238, %p239
      %p241 = scmp.ne.s32.totalorder %s227, %s228
      %p242 = scmp.eq.s32.totalorder %s24, 1
      %p243 = por %p241, %p242
      %p245 = scmp.ne.s32.totalorder %s228, %s244
      %p246 = scmp.eq.s32.totalorder %s24, 0
      %p247 = por %p245, %p246
      %p248 = scmp.le.s32.totalorder 1, %s18
      %p249 = scmp.lt.s32.totalorder %s18, 3
      %p250 = pnand %p248, %p249
      %p251 = pneg %p250
      // Predicated region
      $region9: #{tpu_custom_call.1} parent=5 // pred_check
        _
      $region10: #{tpu_custom_call.1} parent=5 // pred_check_branch
        %253 = sbr.rel (%p250) target = $region12
      $region11: #{tpu_custom_call.1} parent=5 // pred_region
        %s254 = ssub.s32 %s18, 1
        // Predicated region
        $region13: #{tpu_custom_call.1} parent=11 // pred_check
          %p255 = pneg %p56
        $region14: #{tpu_custom_call.1} parent=11 // pred_check_branch
          %257 = sbr.rel (%p255) target = $region16
        $region15: #{tpu_custom_call.1} parent=11 // pred_region
          %s259 = ssub.s32 128, 128
          %260 = vsyncadd [#allocation3], %s259
          %s261 = smul.addr %s28, 128
          %s262 = scalar_lea.hbm %s0, %s261
          %s264 = sshll.u32 [#allocation2], 4
          %s265 = int_to_ptr.vmem [resolvable:$true] %s264
          %267 = dma.hbm_to_vmem [thread:$0]  %s262, 128, %s265, [#allocation3]
        $region16: #{tpu_custom_call.1} parent=11 // pred_fallthru
          _
        // Predicated region
        $region17: #{tpu_custom_call.1} parent=11 // pred_check
          %p268 = pneg %p82
        $region18: #{tpu_custom_call.1} parent=11 // pred_check_branch
          %270 = sbr.rel (%p268) target = $region20
        $region19: #{tpu_custom_call.1} parent=11 // pred_region
          %s272 = ssub.s32 128, 128
          %273 = vsyncadd [#allocation6], %s272
          %s274 = smul.addr %s28, 128
          %s275 = scalar_lea.hbm %s1, %s274
          %s277 = sshll.u32 [#allocation5], 4
          %s278 = int_to_ptr.vmem [resolvable:$true] %s277
          %280 = dma.hbm_to_vmem [thread:$0]  %s275, 128, %s278, [#allocation6]
        $region20: #{tpu_custom_call.1} parent=11 // pred_fallthru
          _
      $region12: #{tpu_custom_call.1} parent=5 // pred_fallthru
        _
      %p281 = scmp.lt.s32.totalorder %s18, 2
      // Predicated region
      $region21: #{tpu_custom_call.1} parent=5 // pred_check
        %p282 = pneg %p281
      $region22: #{tpu_custom_call.1} parent=5 // pred_check_branch
        %284 = sbr.rel (%p282) target = $region24
      $region23: #{tpu_custom_call.1} parent=5 // pred_region
        // Predicated region
        $region25: #{tpu_custom_call.1} parent=23 // pred_check
          %p285 = pneg %p102
        $region26: #{tpu_custom_call.1} parent=23 // pred_check_branch
          %287 = sbr.rel (%p285) target = $region28
        $region27: #{tpu_custom_call.1} parent=23 // pred_region
          %s288 = sand.u32 %s18, 1
          %s289 = scalar_lea.sflag [#allocation3], %s288
          %s290 = sand.u32 %s92, 1
          %s291 = smul.addr %s290, 24
          %s292 = scalar_lea.vmem [#allocation7], %s291
          %s294 = ssub.s32 384, 384
          %295 = vsyncadd %s289, %s294
          %s296 = smul.addr %s25, 3
          %s297 = smul.addr %s296, 128
          %s298 = scalar_lea.hbm %s2, %s297
          %s299 = sshll.u32 %s292, 4
          %s300 = int_to_ptr.vmem [resolvable:$true] %s299
          %305 = dma.hbm_to_vmem [thread:$0]  %s298, 384, %s300, %s289, 128, 128, 8
        $region28: #{tpu_custom_call.1} parent=23 // pred_fallthru
          _
        // Predicated region
        $region29: #{tpu_custom_call.1} parent=23 // pred_check
          %p306 = pneg %p128
        $region30: #{tpu_custom_call.1} parent=23 // pred_check_branch
          %308 = sbr.rel (%p306) target = $region32
        $region31: #{tpu_custom_call.1} parent=23 // pred_region
          %s309 = sand.u32 %s18, 1
          %s310 = scalar_lea.sflag [#allocation3], %s309
          %s311 = sand.u32 %s118, 1
          %s312 = smul.addr %s311, 8
          %s313 = scalar_lea.vmem [#allocation8], %s312
          %s315 = ssub.s32 128, 128
          %316 = vsyncadd %s310, %s315
          %s317 = smul.addr %s25, 128
          %s318 = scalar_lea.hbm %s3, %s317
          %s320 = sshll.u32 %s313, 4
          %s321 = int_to_ptr.vmem [resolvable:$true] %s320
          %323 = dma.hbm_to_vmem [thread:$0]  %s318, 128, %s321, %s310
        $region32: #{tpu_custom_call.1} parent=23 // pred_fallthru
          _
        // Predicated region
        $region33: #{tpu_custom_call.1} parent=23 // pred_check
          %p324 = pneg %p154
        $region34: #{tpu_custom_call.1} parent=23 // pred_check_branch
          %326 = sbr.rel (%p324) target = $region36
        $region35: #{tpu_custom_call.1} parent=23 // pred_region
          %p327 = scmp.lt.s32.totalorder %s25, 1
          %s328 = scalar_select %p327, %s25, 1
          %s329 = scalar_lea.vmem %s4, %s328
        $region36: #{tpu_custom_call.1} parent=23 // pred_fallthru
          _
        // Predicated region
        $region37: #{tpu_custom_call.1} parent=23 // pred_check
          %p330 = pneg %p180
        $region38: #{tpu_custom_call.1} parent=23 // pred_check_branch
          %332 = sbr.rel (%p330) target = $region40
        $region39: #{tpu_custom_call.1} parent=23 // pred_region
          %s333 = sand.u32 %s18, 1
          %s334 = scalar_lea.sflag [#allocation3], %s333
          %s335 = sand.u32 %s170, 1
          %s336 = smul.addr %s335, 256
          %s337 = scalar_lea.vmem [#allocation9], %s336
          %s339 = ssub.s32 4096, 4096
          %340 = vsyncadd %s334, %s339
          %s341 = smul.addr %s25, 32
          %s342 = smul.addr %s341, 128
          %s343 = scalar_lea.hbm %s5, %s342
          %s344 = sshll.u32 %s337, 4
          %s345 = int_to_ptr.vmem [resolvable:$true] %s344
          %350 = dma.hbm_to_vmem [thread:$0]  %s343, 4096, %s345, %s334, 256, 256, 16
        $region40: #{tpu_custom_call.1} parent=23 // pred_fallthru
          _
        // Predicated region
        $region41: #{tpu_custom_call.1} parent=23 // pred_check
          %p351 = pneg %p206
        $region42: #{tpu_custom_call.1} parent=23 // pred_check_branch
          %353 = sbr.rel (%p351) target = $region44
        $region43: #{tpu_custom_call.1} parent=23 // pred_region
          %p354 = scmp.lt.s32.totalorder %s25, 1
          %s355 = scalar_select %p354, %s25, 1
          %s356 = smul.addr %s355, 2
          %s357 = scalar_lea.vmem %s6, %s356
        $region44: #{tpu_custom_call.1} parent=23 // pred_fallthru
          _
      $region24: #{tpu_custom_call.1} parent=5 // pred_fallthru
        _
      %p358 = scmp.le.s32.totalorder 1, %s18
      %p359 = scmp.lt.s32.totalorder %s18, 3
      %p360 = pnand %p358, %p359
      %p361 = pneg %p360
      // Predicated region
      $region45: #{tpu_custom_call.1} parent=5 // pred_check
        _
      $region46: #{tpu_custom_call.1} parent=5 // pred_check_branch
        %363 = sbr.rel (%p360) target = $region48
      $region47: #{tpu_custom_call.1} parent=5 // pred_region
        %s364 = ssub.s32 %s18, 1
        // Predicated region
        $region49: #{tpu_custom_call.1} parent=47 // pred_check
          %p365 = pneg %p56
        $region50: #{tpu_custom_call.1} parent=47 // pred_check_branch
          %367 = sbr.rel (%p365) target = $region52
        $region51: #{tpu_custom_call.1} parent=47 // pred_region
          %368 = dma.done [#allocation3], 128
        $region52: #{tpu_custom_call.1} parent=47 // pred_fallthru
          _
        // Predicated region
        $region53: #{tpu_custom_call.1} parent=47 // pred_check
          %p369 = pneg %p82
        $region54: #{tpu_custom_call.1} parent=47 // pred_check_branch
          %371 = sbr.rel (%p369) target = $region56
        $region55: #{tpu_custom_call.1} parent=47 // pred_region
          %372 = dma.done [#allocation6], 128
        $region56: #{tpu_custom_call.1} parent=47 // pred_fallthru
          _
        %s373 = sand.u32 %s23, 1
        %s374 = scalar_lea.sflag [#allocation3], %s373
        %s375 = sand.u32 %s95, 1
        %s376 = smul.addr %s375, 24
        %s377 = scalar_lea.vmem [#allocation7], %s376
        // Predicated region
        $region57: #{tpu_custom_call.1} parent=47 // pred_check
          %p378 = pneg %p108
        $region58: #{tpu_custom_call.1} parent=47 // pred_check_branch
          %380 = sbr.rel (%p378) target = $region60
        $region59: #{tpu_custom_call.1} parent=47 // pred_region
          %381 = dma.done %s374, 384
        $region60: #{tpu_custom_call.1} parent=47 // pred_fallthru
          _
        %s382 = sand.u32 %s23, 1
        %s383 = scalar_lea.sflag [#allocation3], %s382
        %s384 = sand.u32 %s121, 1
        %s385 = smul.addr %s384, 8
        %s386 = scalar_lea.vmem [#allocation8], %s385
        // Predicated region
        $region61: #{tpu_custom_call.1} parent=47 // pred_check
          %p387 = pneg %p134
        $region62: #{tpu_custom_call.1} parent=47 // pred_check_branch
          %389 = sbr.rel (%p387) target = $region64
        $region63: #{tpu_custom_call.1} parent=47 // pred_region
          %390 = dma.done %s383, 128
        $region64: #{tpu_custom_call.1} parent=47 // pred_fallthru
          _
        %s391 = sand.u32 %s23, 1
        %s392 = scalar_lea.sflag [#allocation3], %s391
        %s393 = sand.u32 %s173, 1
        %s394 = smul.addr %s393, 256
        %s395 = scalar_lea.vmem [#allocation9], %s394
        // Predicated region
        $region65: #{tpu_custom_call.1} parent=47 // pred_check
          %p396 = pneg %p186
        $region66: #{tpu_custom_call.1} parent=47 // pred_check_branch
          %398 = sbr.rel (%p396) target = $region68
        $region67: #{tpu_custom_call.1} parent=47 // pred_region
          %399 = dma.done %s392, 4096
        $region68: #{tpu_custom_call.1} parent=47 // pred_fallthru
          _
        %p400 = pneg %p56
        %p401 = pneg %p53
        %p402 = pneg %p82
        %p403 = pneg %p79
        %s404 = sand.u32 %s23, 1
        %s405 = scalar_lea.sflag [#allocation3], %s404
        %s406 = sand.u32 %s95, 1
        %s407 = smul.addr %s406, 24
        %s408 = scalar_lea.vmem [#allocation7], %s407
        %p409 = pneg %p108
        %p410 = pneg %p105
        %s411 = sand.u32 %s23, 1
        %s412 = scalar_lea.sflag [#allocation3], %s411
        %s413 = sand.u32 %s121, 1
        %s414 = smul.addr %s413, 8
        %s415 = scalar_lea.vmem [#allocation8], %s414
        %p416 = pneg %p134
        %p417 = pneg %p131
        %p418 = scmp.lt.s32.totalorder %s27, 1
        %s419 = scalar_select %p418, %s27, 1
        %s420 = scalar_lea.vmem %s4, %s419
        %p421 = pneg %p160
        %p422 = pneg %p157
        %s423 = sand.u32 %s23, 1
        %s424 = scalar_lea.sflag [#allocation3], %s423
        %s425 = sand.u32 %s173, 1
        %s426 = smul.addr %s425, 256
        %s427 = scalar_lea.vmem [#allocation9], %s426
        %p428 = pneg %p186
        %p429 = pneg %p183
        %p430 = scmp.lt.s32.totalorder %s27, 1
        %s431 = scalar_select %p430, %s27, 1
        %s432 = smul.addr %s431, 2
        %s433 = scalar_lea.vmem %s6, %s432
        %p434 = pneg %p212
        %p435 = pneg %p209
        %p436 = pneg %p240
        %p437 = pneg %p237
        %s438 = sand.u32 %s227, 1
        %s439 = scalar_lea.sflag [#allocation4], %s438
        %s440 = sand.u32 %s227, 1
        %s441 = smul.addr %s440, 16
        %s442 = scalar_lea.vmem [#allocation10], %s441
        %p443 = scmp.lt.s32.totalorder %s27, 1
        %s444 = scalar_select %p443, %s27, 1
        %s445 = scalar_lea.vmem %s4, %s444
        %p446 = scmp.lt.s32.totalorder %s27, 1
        %s447 = scalar_select %p446, %s27, 1
        %s448 = smul.addr %s447, 2
        %s449 = scalar_lea.vmem %s6, %s448
        %v450 = vld [vmem:[#allocation2] sm:$0xff]
        %v451 = vld [vmem:[%s377] sm:$0xff]
        %v452 = vld [vmem:[%s377 + $0x8] sm:$0xff]
        %v453 = vld [vmem:[%s377 + $0x10] sm:$0xff]
        %v454 = vld [vmem:[#allocation5] sm:$0xff]
        %v455 = vld [vmem:[%s386] sm:$0xff]
        %vm456 = vcmask 64512
        %v458 = vsel %vm456, %v454, 0
        %460 = vmatprep.subr.mxu0 0.0
        %461 = vmatpush1.msra.mxu0 %v455
        %462 = vmatprep.subr.mxu0 0.0
        %463 = vmatpush1.msra.mxu0 0.0
        %464 = vmatprep.subr.mxu0 0.0
        %465 = vmatpush1.msra.mxu0 0.0
        %466 = vmatprep.subr.mxu0 0.0
        %467 = vmatpush1.msra.mxu0 0.0
        %468 = vmatprep.subr.mxu0 0.0
        %469 = vmatpush1.msra.mxu0 0.0
        %470 = vmatprep.subr.mxu0 0.0
        %471 = vmatpush1.msra.mxu0 0.0
        %472 = vmatprep.subr.mxu0 0.0
        %473 = vmatpush1.msra.mxu0 0.0
        %474 = vmatprep.subr.mxu0 0.0
        %475 = vmatpush1.msra.mxu0 0.0
        %476 = vmatprep.subr.mxu0 0.0
        %477 = vmatpush1.msra.mxu0 0.0
        %478 = vmatprep.subr.mxu0 0.0
        %479 = vmatpush1.msra.mxu0 0.0
        %480 = vmatprep.subr.mxu0 0.0
        %481 = vmatpush1.msra.mxu0 0.0
        %482 = vmatprep.subr.mxu0 0.0
        %483 = vmatpush1.msra.mxu0 0.0
        %484 = vmatprep.subr.mxu0 0.0
        %485 = vmatpush1.msra.mxu0 0.0
        %486 = vmatprep.subr.mxu0 0.0
        %487 = vmatpush1.msra.mxu0 0.0
        %488 = vmatprep.subr.mxu0 0.0
        %489 = vmatpush1.msra.mxu0 0.0
        %490 = vmatprep.subr.mxu0 0.0
        %491 = vmatpush1.msra.mxu0 0.0
        %492 = vmatprep.subr.mxu0 0.0
        %493 = vmatpush1.msra.mxu0 0.0
        %494 = vmatprep.subr.mxu0 0.0
        %495 = vmatpush1.msra.mxu0 0.0
        %496 = vmatprep.subr.mxu0 0.0
        %497 = vmatpush1.msra.mxu0 0.0
        %498 = vmatprep.subr.mxu0 0.0
        %499 = vmatpush1.msra.mxu0 0.0
        %500 = vmatprep.subr.mxu0 0.0
        %501 = vmatpush1.msra.mxu0 0.0
        %502 = vmatprep.subr.mxu0 0.0
        %503 = vmatpush1.msra.mxu0 0.0
        %504 = vmatprep.subr.mxu0 0.0
        %505 = vmatpush1.msra.mxu0 0.0
        %506 = vmatprep.subr.mxu0 0.0
        %507 = vmatpush1.msra.mxu0 0.0
        %508 = vmatprep.subr.mxu0 0.0
        %509 = vmatpush1.msra.mxu0 0.0
        %510 = vmatprep.subr.mxu0 0.0
        %511 = vmatpush1.msra.mxu0 0.0
        %512 = vmatprep.subr.mxu0 0.0
        %513 = vmatpush1.msra.mxu0 0.0
        %514 = vmatprep.subr.mxu0 0.0
        %515 = vmatpush1.msra.mxu0 0.0
        %516 = vmatprep.subr.mxu0 0.0
        %517 = vmatpush1.msra.mxu0 0.0
        %518 = vmatprep.subr.mxu0 0.0
        %519 = vmatpush1.msra.mxu0 0.0
        %520 = vmatprep.subr.mxu0 0.0
        %521 = vmatpush1.msra.mxu0 0.0
        %522 = vmatprep.subr.mxu0 0.0
        %523 = vmatpush1.msra.mxu0 0.0
        %524 = vmatprep.mubr.f32.mxu0 0.0
        %525 = vmatmul.mubr.f32.gmra.mrb[0].mxu0 %v458
        %v526 = vpop.f32.mrb[0].mxu0
        %v527 = vadd.f32 0.0, %v526
        %v528 = vpop.f32.mrb[0].mxu0
        %529 = vdwg.mxu0
        %vm530 = vcmask 195584
        %v532 = vsel %vm530, %v450, 0
        %534 = vmatprep.subr.mxu0 0.0
        %535 = vmatpush1.msra.mxu0 %v451
        %536 = vmatprep.subr.mxu0 0.0
        %537 = vmatpush1.msra.mxu0 %v452
        %538 = vmatprep.subr.mxu0 0.0
        %539 = vmatpush1.msra.mxu0 %v453
        %540 = vmatprep.subr.mxu0 0.0
        %541 = vmatpush1.msra.mxu0 0.0
        %542 = vmatprep.subr.mxu0 0.0
        %543 = vmatpush1.msra.mxu0 0.0
        %544 = vmatprep.subr.mxu0 0.0
        %545 = vmatpush1.msra.mxu0 0.0
        %546 = vmatprep.subr.mxu0 0.0
        %547 = vmatpush1.msra.mxu0 0.0
        %548 = vmatprep.subr.mxu0 0.0
        %549 = vmatpush1.msra.mxu0 0.0
        %550 = vmatprep.subr.mxu0 0.0
        %551 = vmatpush1.msra.mxu0 0.0
        %552 = vmatprep.subr.mxu0 0.0
        %553 = vmatpush1.msra.mxu0 0.0
        %554 = vmatprep.subr.mxu0 0.0
        %555 = vmatpush1.msra.mxu0 0.0
        %556 = vmatprep.subr.mxu0 0.0
        %557 = vmatpush1.msra.mxu0 0.0
        %558 = vmatprep.subr.mxu0 0.0
        %559 = vmatpush1.msra.mxu0 0.0
        %560 = vmatprep.subr.mxu0 0.0
        %561 = vmatpush1.msra.mxu0 0.0
        %562 = vmatprep.subr.mxu0 0.0
        %563 = vmatpush1.msra.mxu0 0.0
        %564 = vmatprep.subr.mxu0 0.0
        %565 = vmatpush1.msra.mxu0 0.0
        %566 = vmatprep.subr.mxu0 0.0
        %567 = vmatpush1.msra.mxu0 0.0
        %568 = vmatprep.subr.mxu0 0.0
        %569 = vmatpush1.msra.mxu0 0.0
        %570 = vmatprep.subr.mxu0 0.0
        %571 = vmatpush1.msra.mxu0 0.0
        %572 = vmatprep.subr.mxu0 0.0
        %573 = vmatpush1.msra.mxu0 0.0
        %574 = vmatprep.subr.mxu0 0.0
        %575 = vmatpush1.msra.mxu0 0.0
        %576 = vmatprep.subr.mxu0 0.0
        %577 = vmatpush1.msra.mxu0 0.0
        %578 = vmatprep.subr.mxu0 0.0
        %579 = vmatpush1.msra.mxu0 0.0
        %580 = vmatprep.subr.mxu0 0.0
        %581 = vmatpush1.msra.mxu0 0.0
        %582 = vmatprep.subr.mxu0 0.0
        %583 = vmatpush1.msra.mxu0 0.0
        %584 = vmatprep.subr.mxu0 0.0
        %585 = vmatpush1.msra.mxu0 0.0
        %586 = vmatprep.subr.mxu0 0.0
        %587 = vmatpush1.msra.mxu0 0.0
        %588 = vmatprep.subr.mxu0 0.0
        %589 = vmatpush1.msra.mxu0 0.0
        %590 = vmatprep.subr.mxu0 0.0
        %591 = vmatpush1.msra.mxu0 0.0
        %592 = vmatprep.subr.mxu0 0.0
        %593 = vmatpush1.msra.mxu0 0.0
        %594 = vmatprep.subr.mxu0 0.0
        %595 = vmatpush1.msra.mxu0 0.0
        %596 = vmatprep.subr.mxu0 0.0
        %597 = vmatpush1.msra.mxu0 0.0
        %598 = vmatprep.mubr.f32.mxu0 0.0
        %599 = vmatmul.mubr.f32.gmra.mrb[0].mxu0 %v532
        %v600 = vpop.f32.mrb[0].mxu0
        %v601 = vadd.f32 %v527, %v600
        %v602 = vpop.f32.mrb[0].mxu0
        %603 = vdwg.mxu0
        %v604 = vld [vmem:[%s445] sm:$0x1]
        %v606 = vlaneseq
        %v607 = vshrl.u32 %v606, 7
        %v608 = vsub.s32 0, %v607
        %v609 = vrot.slane %v604, %v608
        %v611 = vadd.f32 %v601, %v609
        %v612 = vmax.f32 %v611, 0.0
        %v613 = vld [vmem:[%s395] sm:$0xff]
        %v614 = vld [vmem:[%s395 + $0x8] sm:$0xff]
        %v615 = vld [vmem:[%s395 + $0x10] sm:$0xff]
        %v616 = vld [vmem:[%s395 + $0x18] sm:$0xff]
        %v617 = vld [vmem:[%s395 + $0x20] sm:$0xff]
        %v618 = vld [vmem:[%s395 + $0x28] sm:$0xff]
        %v619 = vld [vmem:[%s395 + $0x30] sm:$0xff]
        %v620 = vld [vmem:[%s395 + $0x38] sm:$0xff]
        %v621 = vld [vmem:[%s395 + $0x40] sm:$0xff]
        %v622 = vld [vmem:[%s395 + $0x48] sm:$0xff]
        %v623 = vld [vmem:[%s395 + $0x50] sm:$0xff]
        %v624 = vld [vmem:[%s395 + $0x58] sm:$0xff]
        %v625 = vld [vmem:[%s395 + $0x60] sm:$0xff]
        %v626 = vld [vmem:[%s395 + $0x68] sm:$0xff]
        %v627 = vld [vmem:[%s395 + $0x70] sm:$0xff]
        %v628 = vld [vmem:[%s395 + $0x78] sm:$0xff]
        %v629 = vld [vmem:[%s395 + $0x80] sm:$0xff]
        %v630 = vld [vmem:[%s395 + $0x88] sm:$0xff]
        %v631 = vld [vmem:[%s395 + $0x90] sm:$0xff]
        %v632 = vld [vmem:[%s395 + $0x98] sm:$0xff]
        %v633 = vld [vmem:[%s395 + $0xa0] sm:$0xff]
        %v634 = vld [vmem:[%s395 + $0xa8] sm:$0xff]
        %v635 = vld [vmem:[%s395 + $0xb0] sm:$0xff]
        %v636 = vld [vmem:[%s395 + $0xb8] sm:$0xff]
        %v637 = vld [vmem:[%s395 + $0xc0] sm:$0xff]
        %v638 = vld [vmem:[%s395 + $0xc8] sm:$0xff]
        %v639 = vld [vmem:[%s395 + $0xd0] sm:$0xff]
        %v640 = vld [vmem:[%s395 + $0xd8] sm:$0xff]
        %v641 = vld [vmem:[%s395 + $0xe0] sm:$0xff]
        %v642 = vld [vmem:[%s395 + $0xe8] sm:$0xff]
        %v643 = vld [vmem:[%s395 + $0xf0] sm:$0xff]
        %v644 = vld [vmem:[%s395 + $0xf8] sm:$0xff]
        %v645 = vld [vmem:[%s449] sm:$0x3]
        %v647 = vlaneseq
        %v648 = vshrl.u32 %v647, 7
        %v649 = vsub.s32 0, %v648
        %v650 = vrot.slane %v645, %v649
        %v651 = vlaneseq
        %v652 = vshrl.u32 %v651, 7
        %v653 = vsub.s32 1, %v652
        %v654 = vrot.slane %v645, %v653
        %657 = vmatprep.subr.mxu0 %v614
        %658 = vmatpush1.msra.mxu0 %v613
        %659 = vmatprep.subr.mxu0 %v616
        %660 = vmatpush1.msra.mxu0 %v615
        %661 = vmatprep.subr.mxu0 %v618
        %662 = vmatpush1.msra.mxu0 %v617
        %663 = vmatprep.subr.mxu0 %v620
        %664 = vmatpush1.msra.mxu0 %v619
        %665 = vmatprep.subr.mxu0 %v622
        %666 = vmatpush1.msra.mxu0 %v621
        %667 = vmatprep.subr.mxu0 %v624
        %668 = vmatpush1.msra.mxu0 %v623
        %669 = vmatprep.subr.mxu0 %v626
        %670 = vmatpush1.msra.mxu0 %v625
        %671 = vmatprep.subr.mxu0 %v628
        %672 = vmatpush1.msra.mxu0 %v627
        %673 = vmatprep.subr.mxu0 %v630
        %674 = vmatpush1.msra.mxu0 %v629
        %675 = vmatprep.subr.mxu0 %v632
        %676 = vmatpush1.msra.mxu0 %v631
        %677 = vmatprep.subr.mxu0 %v634
        %678 = vmatpush1.msra.mxu0 %v633
        %679 = vmatprep.subr.mxu0 %v636
        %680 = vmatpush1.msra.mxu0 %v635
        %681 = vmatprep.subr.mxu0 %v638
        %682 = vmatpush1.msra.mxu0 %v637
        %683 = vmatprep.subr.mxu0 %v640
        %684 = vmatpush1.msra.mxu0 %v639
        %685 = vmatprep.subr.mxu0 %v642
        %686 = vmatpush1.msra.mxu0 %v641
        %687 = vmatprep.subr.mxu0 %v644
        %688 = vmatpush1.msra.mxu0 %v643
        %689 = vmatprep.subr.mxu0 0.0
        %690 = vmatpush1.msra.mxu0 0.0
        %691 = vmatprep.subr.mxu0 0.0
        %692 = vmatpush1.msra.mxu0 0.0
        %693 = vmatprep.subr.mxu0 0.0
        %694 = vmatpush1.msra.mxu0 0.0
        %695 = vmatprep.subr.mxu0 0.0
        %696 = vmatpush1.msra.mxu0 0.0
        %697 = vmatprep.subr.mxu0 0.0
        %698 = vmatpush1.msra.mxu0 0.0
        %699 = vmatprep.subr.mxu0 0.0
        %700 = vmatpush1.msra.mxu0 0.0
        %701 = vmatprep.subr.mxu0 0.0
        %702 = vmatpush1.msra.mxu0 0.0
        %703 = vmatprep.subr.mxu0 0.0
        %704 = vmatpush1.msra.mxu0 0.0
        %705 = vmatprep.subr.mxu0 0.0
        %706 = vmatpush1.msra.mxu0 0.0
        %707 = vmatprep.subr.mxu0 0.0
        %708 = vmatpush1.msra.mxu0 0.0
        %709 = vmatprep.subr.mxu0 0.0
        %710 = vmatpush1.msra.mxu0 0.0
        %711 = vmatprep.subr.mxu0 0.0
        %712 = vmatpush1.msra.mxu0 0.0
        %713 = vmatprep.subr.mxu0 0.0
        %714 = vmatpush1.msra.mxu0 0.0
        %715 = vmatprep.subr.mxu0 0.0
        %716 = vmatpush1.msra.mxu0 0.0
        %717 = vmatprep.subr.mxu0 0.0
        %718 = vmatpush1.msra.mxu0 0.0
        %719 = vmatprep.subr.mxu0 0.0
        %720 = vmatpush1.msra.mxu0 0.0
        %721 = vmatprep.mubr.f32.mxu0 0.0
        %722 = vmatmul.mubr.f32.gmra.mrb[0].mxu0 %v612
        %v723 = vpop.f32.mrb[0].mxu0
        %v724 = vadd.f32 %v650, %v723
        %v725 = vpop.f32.mrb[0].mxu0
        %v726 = vadd.f32 %v654, %v725
        %727 = vdwg.mxu0
        %728 = vst [vmem:[%s442] sm:$0xff] %v724
        %729 = vst [vmem:[%s442 + $0x8] sm:$0xff] %v726
        %s730 = sand.u32 %s227, 1
        %s731 = scalar_lea.sflag [#allocation4], %s730
        %s732 = sand.u32 %s227, 1
        %s733 = smul.addr %s732, 16
        %s734 = scalar_lea.vmem [#allocation10], %s733
        // Predicated region
        $region69: #{tpu_custom_call.1} parent=47 // pred_check
          %p735 = pneg %p237
        $region70: #{tpu_custom_call.1} parent=47 // pred_check_branch
          %737 = sbr.rel (%p735) target = $region72
        $region71: #{tpu_custom_call.1} parent=47 // pred_region
          %s739 = ssub.s32 256, 256
          %740 = vsyncadd %s731, %s739
          %s741 = smul.addr %s28, 2
          %s742 = smul.addr %s27, 2
          %s743 = sadd.s32 %s741, %s742
          %s744 = smul.addr %s743, 128
          %s745 = scalar_lea.hbm %s7, %s744
          %s747 = sshll.u32 %s734, 4
          %s748 = int_to_ptr.vmem [resolvable:$true] %s747
          %750 = dma.vmem_to_hbm [thread:$0]  %s748, 256, %s745, %s731
        $region72: #{tpu_custom_call.1} parent=47 // pred_fallthru
          _
      $region48: #{tpu_custom_call.1} parent=5 // pred_fallthru
        _
      %p751 = scmp.le.s32.totalorder 2, %s18
      // Predicated region
      $region73: #{tpu_custom_call.1} parent=5 // pred_check
        %p752 = pneg %p751
      $region74: #{tpu_custom_call.1} parent=5 // pred_check_branch
        %754 = sbr.rel (%p752) target = $region76
      $region75: #{tpu_custom_call.1} parent=5 // pred_region
        %s755 = ssub.s32 %s18, 2
        // Predicated region
        $region77: #{tpu_custom_call.1} parent=75 // pred_check
          %p756 = pneg %p243
        $region78: #{tpu_custom_call.1} parent=75 // pred_check_branch
          %758 = sbr.rel (%p756) target = $region80
        $region79: #{tpu_custom_call.1} parent=75 // pred_region
          %s759 = sand.u32 %s228, 1
          %s760 = scalar_lea.sflag [#allocation4], %s759
          %s761 = sand.u32 %s228, 1
          %s762 = smul.addr %s761, 16
          %s763 = scalar_lea.vmem [#allocation10], %s762
          %764 = dma.done %s760, 256
        $region80: #{tpu_custom_call.1} parent=75 // pred_fallthru
          _
      $region76: #{tpu_custom_call.1} parent=5 // pred_fallthru
        _
    $region6: #{tpu_custom_call.1} parent=1 // loop_footer
      %s22 = sadd.s32 1, %s18
    $region7: #{tpu_custom_call.1} parent=1 // loop_footer_branch
      %17 = sbr.rel target = $region3
    $region8: #{tpu_custom_call.1} parent=1 // loop_exit
      _
    %765 = vsyncpa [#allocation3], 1
    %s766 = scalar_lea.sflag [#allocation3], 1
    %767 = vsyncpa %s766, 1
    %768 = vsyncpa [#allocation6], 1
    %769 = vsyncpa [#allocation4], 1
    %s770 = scalar_lea.sflag [#allocation4], 1
    %771 = vsyncpa %s770, 1

</llo_original>
